<compile_context>
chip_gen: v5e
topology: v5e:2x2
jax: 0.10.0
libtpu: 0.0.40
codegen_flags: <defaults>
</compile_context>

<pallas_src>
import jax
import jax.numpy as jnp
from jax.experimental import pallas as pl
from jax.experimental.pallas import tpu as pltpu

_LANE = 128
_MIB = 1024 * 1024
_PARAM_ORDER = (
    ("w1", "b1"), ("w2", "b2"), ("w3", "b3"), ("wz", "bz"),
    ("w4", "b4"), ("w5", "b5"), ("w6", "b6"), ("wx", "bx"),
)

# Errors that plausibly mean "this jax/Mosaic build rejects pl.Buffered(1)"
# (or the buffered build OOM'd).  Genuine Python bugs (AttributeError, etc.)
# still propagate -- no blanket `except Exception`.
_BUFFERED_FALLBACK_ERRORS = tuple(
    e for e in (
        TypeError, ValueError, NotImplementedError, AssertionError, RuntimeError,
        getattr(pltpu, "LoweringException", None),
        getattr(getattr(jax, "errors", None), "JaxRuntimeError", None),
    )
    if isinstance(e, type) and issubclass(e, BaseException)
)


def _round_up(n, m):
    return ((n + m - 1) // m) * m


def _pad2(a, rows, cols):
    r, c = a.shape
    if (r, c) == (rows, cols):
        return a
    return jnp.pad(a, ((0, rows - r), (0, cols - c)))


# --------------------------------------------------------------------------
# Kernel: fused 8-layer MLP on one (batch_tile, *) slab of rows.
# --------------------------------------------------------------------------
def _ae_kernel(
    x_ref,
    w1_ref, b1_ref, w2_ref, b2_ref, w3_ref, b3_ref, wz_ref, bz_ref,
    w4_ref, b4_ref, w5_ref, b5_ref, w6_ref, b6_ref, wx_ref, bx_ref,
    xbar_ref, z_ref,
):
    def lin(h, w_ref, b_ref):
        # bf16 operands on the MXU, f32 accumulation, f32 bias add.
        return (
            jnp.dot(h.astype(w_ref.dtype), w_ref[...],
                    preferred_element_type=jnp.float32)
            + b_ref[...]
        )

    x = x_ref[...]                                   # already bf16 (cast in wrapper)

    # encoder
    h = jnp.maximum(lin(x, w1_ref, b1_ref), 0.0)     # enc_1 + relu
    h = jnp.maximum(lin(h, w2_ref, b2_ref), 0.0)     # enc_2 + relu
    h = jnp.maximum(lin(h, w3_ref, b3_ref), 0.0)     # enc_3 + relu
    z = lin(h, wz_ref, bz_ref)                       # z_layer (no relu)

    # decoder
    d = jnp.maximum(lin(z, w4_ref, b4_ref), 0.0)     # dec_1 + relu
    d = jnp.maximum(lin(d, w5_ref, b5_ref), 0.0)     # dec_2 + relu
    d = jnp.maximum(lin(d, w6_ref, b6_ref), 0.0)     # dec_3 + relu
    x_bar = lin(d, wx_ref, bx_ref)                   # x_bar_layer (no relu)

    z_ref[...] = z.astype(z_ref.dtype)
    xbar_ref[...] = x_bar.astype(xbar_ref.dtype)


# --------------------------------------------------------------------------
# Hardware / VMEM bookkeeping
# --------------------------------------------------------------------------
def _tpu_hw_info():
    """(vmem_capacity_bytes_per_tensorcore, num_tensorcores_per_chip), best effort."""
    kind = ""
    try:
        kind = (getattr(jax.devices()[0], "device_kind", "") or "").lower()
    except Exception:
        pass
    is_v7 = "7" in kind                      # "tpu7x" etc.; v2..v6 have no '7'
    vmem = 64 * _MIB if is_v7 else 128 * _MIB
    try:
        info = pltpu.get_tpu_info()
        v = getattr(info, "vmem_capacity_bytes", None)
        if isinstance(v, int) and v > 0:
            vmem = v
    except Exception:
        pass
    if is_v7:
        vmem = min(vmem, 64 * _MIB)          # 64 MiB per TensorCore on v7x
    num_tc = 2 if is_v7 else 1               # v5e/v6e: 1 TC per chip
    return vmem, num_tc


def _vmem_budget(vmem_capacity_bytes):
    """(tile-selection budget, vmem_limit_bytes) per generation."""
    if vmem_capacity_bytes <= 80 * _MIB:     # v7x-class: 64 MiB per TC
        limit = 56 * _MIB
    else:                                    # v5e / v6e: 128 MiB per TC
        limit = 100 * _MIB
    return limit - 4 * _MIB, limit           # leave headroom for Mosaic scratch


def _supports_single_buffering():
    if not hasattr(pl, "Buffered"):
        return False
    try:
        pl.BlockSpec((8, _LANE), lambda i: (0, 0), pipeline_mode=pl.Buffered(1))
        return True
    except Exception:
        return False


def _select_batch_tile(B, in_pad, nz_pad, max_width, x_itemsize,
                       weight_bytes, budget, num_tc):
    """Largest batch tile whose modeled working set fits `budget`.  On
    multi-TensorCore chips (v7x) prefer a tile giving an even number of grid
    steps >= num_tc so both cores stay busy; on 1-TC chips just take the
    largest tile that fits (grid=(1,) is fine)."""

    def fits(t):
        x_io = 2 * t * in_pad * x_itemsize            # double-buffered bf16 input
        out_io = 2 * t * (in_pad + nz_pad) * 4        # double-buffered f32 outputs
        act = 4 * t * max_width * 4                   # live f32 activations (conservative)
        return weight_bytes + x_io + out_io + act <= budget

    cap = max(8, _round_up(B, 8))
    cands = [t for t in (1024, 768, 512, 384, 256, 128, 64, 32, 16, 8)
             if t <= cap and fits(t)]
    if not cands:
        return 8

    if num_tc >= 2:
        steps = lambda t: pl.cdiv(B, t)
        even = [t for t in cands if steps(t) >= num_tc and steps(t) % num_tc == 0]
        if even:
            return even[0]
        multi = [t for t in cands if steps(t) >= num_tc]
        if multi:
            return multi[0]
    return cands[0]


# --------------------------------------------------------------------------
# Wrapper
# --------------------------------------------------------------------------
def ae_forward(x, params, *, batch_tile=None, matmul_dtype=jnp.bfloat16,
               vmem_budget_bytes=None, vmem_limit_bytes=None,
               single_buffer_weights=True):
    """x: (B, n_input) f32.  params: dict of (in, out) weights + (1, out) biases
    (PyTorch Linear weights pre-transposed).  Returns (x_bar, z) as f32."""
    B, n_input = x.shape
    n_z = params["wz"].shape[1]

    vmem_cap, num_tc = _tpu_hw_info()
    auto_budget, auto_limit = _vmem_budget(vmem_cap)
    if vmem_budget_bytes is None:
        vmem_budget_bytes = auto_budget
    if vmem_limit_bytes is None:
        vmem_limit_bytes = auto_limit

    # Zero-pad every feature dim to a multiple of 128 (exact math: padded
    # rows/cols are zero so they contribute nothing downstream).
    in_pad = _round_up(n_input, _LANE)
    nz_pad = _round_up(n_z, _LANE)

    padded_params = []
    weight_bytes_1x = 0                      # one resident copy of weights + biases
    max_width = in_pad
    for wname, bname in _PARAM_ORDER:
        din, dout = params[wname].shape
        din_p, dout_p = _round_up(din, _LANE), _round_up(dout, _LANE)
        max_width = max(max_width, dout_p)
        w = _pad2(params[wname].astype(jnp.float32), din_p, dout_p).astype(matmul_dtype)
        b = _pad2(params[bname].astype(jnp.float32), 1, dout_p)   # bias stays f32
        padded_params += [w, b]
        weight_bytes_1x += w.size * w.dtype.itemsize + b.size * 4

    x_itemsize = padded_params[0].dtype.itemsize     # == matmul_dtype itemsize
    use_buffered = single_buffer_weights and _supports_single_buffering()

    def pick_tile(weight_buffers):
        return _select_batch_tile(B, in_pad, nz_pad, max_width, x_itemsize,
                                  weight_buffers * weight_bytes_1x,
                                  vmem_budget_bytes, num_tc)

    def run(use_single_buffer, tile):
        tile = max(8, _round_up(tile, 8))
        B_pad = _round_up(B, tile)
        # Pad + cast x once (bf16): halves the input-tile DMA and VMEM footprint.
        x_p = _pad2(x.astype(matmul_dtype), B_pad, in_pad)

        def tile_spec(cols):
            return pl.BlockSpec((tile, cols), lambda i: (i, 0))

        def const_spec(arr):
            shp = arr.shape
            idx = lambda i: (0,) * len(shp)
            if use_single_buffer:
                # Grid-constant block: one VMEM buffer is enough (never refetched).
                return pl.BlockSpec(shp, idx, pipeline_mode=pl.Buffered(1))
            return pl.BlockSpec(shp, idx)

        grid_spec = pltpu.PrefetchScalarGridSpec(
            num_scalar_prefetch=0,
            grid=(B_pad // tile,),
            in_specs=[tile_spec(in_pad)] + [const_spec(a) for a in padded_params],
            out_specs=[tile_spec(in_pad), tile_spec(nz_pad)],
        )
        call = pl.pallas_call(
            _ae_kernel,
            grid_spec=grid_spec,
            out_shape=(
                jax.ShapeDtypeStruct((B_pad, in_pad), jnp.float32),
                jax.ShapeDtypeStruct((B_pad, nz_pad), jnp.float32),
            ),
            compiler_params=pltpu.CompilerParams(
                dimension_semantics=("parallel",),
                vmem_limit_bytes=vmem_limit_bytes,
            ),
        )
        return call(x_p, *padded_params)

    if batch_tile is not None:
        tile_primary = tile_fallback = batch_tile
    else:
        tile_primary = pick_tile(1 if use_buffered else 2)   # 1x weights if single-buffered
        tile_fallback = pick_tile(2)                          # 2x weights if double-buffered

    if use_buffered:
        try:
            x_bar_p, z_p = run(True, tile_primary)
        except _BUFFERED_FALLBACK_ERRORS:
            # pl.Buffered(1) rejected (or buffered build failed): rebuild with
            # default double-buffered weights AND a tile re-sized for the 2x
            # weight footprint so the fallback actually fits VMEM.
            x_bar_p, z_p = run(False, tile_fallback)
    else:
        x_bar_p, z_p = run(False, tile_fallback)

    return x_bar_p[:B, :n_input], z_p[:B, :n_z]


# --------------------------------------------------------------------------
# Params + reference
# --------------------------------------------------------------------------
def init_ae_params(key, n_enc_1, n_enc_2, n_enc_3, n_dec_1, n_dec_2, n_dec_3,
                   n_input, n_z):
    """Deterministic init.  Weights stored as (in, out); biases as (1, out)."""
    dims = [
        ("w1", "b1", n_input, n_enc_1),
        ("w2", "b2", n_enc_1, n_enc_2),
        ("w3", "b3", n_enc_2, n_enc_3),
        ("wz", "bz", n_enc_3, n_z),
        ("w4", "b4", n_z, n_dec_1),
        ("w5", "b5", n_dec_1, n_dec_2),
        ("w6", "b6", n_dec_2, n_dec_3),
        ("wx", "bx", n_dec_3, n_input),
    ]
    params = {}
    for wname, bname, fan_in, fan_out in dims:
        key, kw, kb = jax.random.split(key, 3)
        bound = 1.0 / jnp.sqrt(fan_in)          # PyTorch Linear default-style uniform
        params[wname] = jax.random.uniform(
            kw, (fan_in, fan_out), jnp.float32, -bound, bound)
        params[bname] = jax.random.uniform(
            kb, (1, fan_out), jnp.float32, -bound, bound)
    return params


def ae_reference(x, params, matmul_dtype=jnp.float32):
    """Plain-JAX reference of the PyTorch forward (optionally bf16-matched)."""
    def lin(h, w, b):
        return jnp.dot(h.astype(matmul_dtype), w.astype(matmul_dtype),
                       preferred_element_type=jnp.float32) + b
    h = jax.nn.relu(lin(x, params["w1"], params["b1"]))
    h = jax.nn.relu(lin(h, params["w2"], params["b2"]))
    h = jax.nn.relu(lin(h, params["w3"], params["b3"]))
    z = lin(h, params["wz"], params["bz"])
    d = jax.nn.relu(lin(z, params["w4"], params["b4"]))
    d = jax.nn.relu(lin(d, params["w5"], params["b5"]))
    d = jax.nn.relu(lin(d, params["w6"], params["b6"]))
    x_bar = lin(d, params["wx"], params["bx"])
    return x_bar, z


if __name__ == "__main__":
    # Small, forward-consistent sizes (tune/benchmark at real SDCN sizes:
    # B in the thousands, n_input 334-1870, widths 500/500/2000).
    n_input, n_z = 64, 32
    n_enc_1, n_enc_2, n_enc_3 = 128, 64, 128
    n_dec_1, n_dec_2, n_dec_3 = 128, 64, 128
    B = 16

    key = jax.random.PRNGKey(0)
    key, kx = jax.random.split(key)
    x = jax.random.normal(kx, (B, n_input), jnp.float32)

    params = init_ae_params(key, n_enc_1, n_enc_2, n_enc_3,
                            n_dec_1, n_dec_2, n_dec_3, n_input, n_z)

    x_bar, z = ae_forward(x, params)   # auto batch_tile, bf16 MXU inputs
    jax.block_until_ready((x_bar, z))

    assert x_bar.shape == (B, n_input) and z.shape == (B, n_z)

    # Exact-semantics f32 reference (loose tol: kernel uses bf16 MXU inputs).
    x_bar_f32, z_f32 = ae_reference(x, params, matmul_dtype=jnp.float32)
    assert jnp.allclose(x_bar, x_bar_f32, atol=5e-2, rtol=5e-2)
    assert jnp.allclose(z, z_f32, atol=5e-2, rtol=5e-2)

    # bf16-matched reference (tight tol: same quantization as the kernel).
    x_bar_bf, z_bf = ae_reference(x, params, matmul_dtype=jnp.bfloat16)
    assert jnp.allclose(x_bar, x_bar_bf, atol=2e-3, rtol=2e-3)
    assert jnp.allclose(z, z_bf, atol=2e-3, rtol=2e-3)

    print("KERNEL_OK")
</pallas_src>

<mosaic_0001>
module attributes {stable_mosaic.version = 11 : i64} {
  func.func @_ae_kernel(%arg0: i32, %arg1: memref<16x128xbf16, #tpu.memory_space<vmem>>, %arg2: memref<128x128xbf16, #tpu.memory_space<vmem>>, %arg3: memref<1x128xf32, #tpu.memory_space<vmem>>, %arg4: memref<128x128xbf16, #tpu.memory_space<vmem>>, %arg5: memref<1x128xf32, #tpu.memory_space<vmem>>, %arg6: memref<128x128xbf16, #tpu.memory_space<vmem>>, %arg7: memref<1x128xf32, #tpu.memory_space<vmem>>, %arg8: memref<128x128xbf16, #tpu.memory_space<vmem>>, %arg9: memref<1x128xf32, #tpu.memory_space<vmem>>, %arg10: memref<128x128xbf16, #tpu.memory_space<vmem>>, %arg11: memref<1x128xf32, #tpu.memory_space<vmem>>, %arg12: memref<128x128xbf16, #tpu.memory_space<vmem>>, %arg13: memref<1x128xf32, #tpu.memory_space<vmem>>, %arg14: memref<128x128xbf16, #tpu.memory_space<vmem>>, %arg15: memref<1x128xf32, #tpu.memory_space<vmem>>, %arg16: memref<128x128xbf16, #tpu.memory_space<vmem>>, %arg17: memref<1x128xf32, #tpu.memory_space<vmem>>, %arg18: memref<16x128xf32, #tpu.memory_space<vmem>>, %arg19: memref<16x128xf32, #tpu.memory_space<vmem>>) attributes {dimension_semantics = [#tpu.dimension_semantics<parallel>], iteration_bounds = array<i64: 1>, scalar_prefetch = 0 : i64, scratch_operands = 0 : i64, tpu.core_type = #tpu.core_type<tc>, window_params = [{transform_indices = @transform_0, window_bounds = array<i64: 16, 128>}, {pipeline_mode = #tpu.pipeline_mode<synchronous>, transform_indices = @transform_1, window_bounds = array<i64: 128, 128>}, {pipeline_mode = #tpu.pipeline_mode<synchronous>, transform_indices = @transform_2, window_bounds = array<i64: 1, 128>}, {pipeline_mode = #tpu.pipeline_mode<synchronous>, transform_indices = @transform_3, window_bounds = array<i64: 128, 128>}, {pipeline_mode = #tpu.pipeline_mode<synchronous>, transform_indices = @transform_4, window_bounds = array<i64: 1, 128>}, {pipeline_mode = #tpu.pipeline_mode<synchronous>, transform_indices = @transform_5, window_bounds = array<i64: 128, 128>}, {pipeline_mode = #tpu.pipeline_mode<synchronous>, transform_indices = @transform_6, window_bounds = array<i64: 1, 128>}, {pipeline_mode = #tpu.pipeline_mode<synchronous>, transform_indices = @transform_7, window_bounds = array<i64: 128, 128>}, {pipeline_mode = #tpu.pipeline_mode<synchronous>, transform_indices = @transform_8, window_bounds = array<i64: 1, 128>}, {pipeline_mode = #tpu.pipeline_mode<synchronous>, transform_indices = @transform_9, window_bounds = array<i64: 128, 128>}, {pipeline_mode = #tpu.pipeline_mode<synchronous>, transform_indices = @transform_10, window_bounds = array<i64: 1, 128>}, {pipeline_mode = #tpu.pipeline_mode<synchronous>, transform_indices = @transform_11, window_bounds = array<i64: 128, 128>}, {pipeline_mode = #tpu.pipeline_mode<synchronous>, transform_indices = @transform_12, window_bounds = array<i64: 1, 128>}, {pipeline_mode = #tpu.pipeline_mode<synchronous>, transform_indices = @transform_13, window_bounds = array<i64: 128, 128>}, {pipeline_mode = #tpu.pipeline_mode<synchronous>, transform_indices = @transform_14, window_bounds = array<i64: 1, 128>}, {pipeline_mode = #tpu.pipeline_mode<synchronous>, transform_indices = @transform_15, window_bounds = array<i64: 128, 128>}, {pipeline_mode = #tpu.pipeline_mode<synchronous>, transform_indices = @transform_16, window_bounds = array<i64: 1, 128>}, {transform_indices = @transform_17, window_bounds = array<i64: 16, 128>}, {transform_indices = @transform_18, window_bounds = array<i64: 16, 128>}]} {
    %c0 = arith.constant 0 : index
    %c0_0 = arith.constant 0 : index
    %0 = vector.load %arg1[%c0, %c0_0] : memref<16x128xbf16, #tpu.memory_space<vmem>>, vector<16x128xbf16>
    %c0_1 = arith.constant 0 : index
    %c0_2 = arith.constant 0 : index
    %1 = vector.load %arg2[%c0_1, %c0_2] : memref<128x128xbf16, #tpu.memory_space<vmem>>, vector<128x128xbf16>
    %cst = arith.constant dense<0.000000e+00> : vector<16x128xf32>
    %2 = tpu.matmul %0, %1, %cst {dimension_numbers = #tpu.dot_dimension_numbers<[1], [0], [0], [1], [0, 0, 1, 1], [], []>} : vector<16x128xbf16>, vector<128x128xbf16>, vector<16x128xf32> -> vector<16x128xf32>
    %c0_3 = arith.constant 0 : index
    %c0_4 = arith.constant 0 : index
    %3 = vector.load %arg3[%c0_3, %c0_4] : memref<1x128xf32, #tpu.memory_space<vmem>>, vector<1x128xf32>
    %4 = vector.broadcast %3 : vector<1x128xf32> to vector<16x128xf32>
    %5 = arith.addf %2, %4 : vector<16x128xf32>
    %cst_5 = arith.constant 0.000000e+00 : f32
    %6 = vector.broadcast %cst_5 : f32 to vector<16x128xf32>
    %7 = arith.maximumf %5, %6 : vector<16x128xf32>
    %8 = arith.truncf %7 : vector<16x128xf32> to vector<16x128xbf16>
    %c0_6 = arith.constant 0 : index
    %c0_7 = arith.constant 0 : index
    %9 = vector.load %arg4[%c0_6, %c0_7] : memref<128x128xbf16, #tpu.memory_space<vmem>>, vector<128x128xbf16>
    %cst_8 = arith.constant dense<0.000000e+00> : vector<16x128xf32>
    %10 = tpu.matmul %8, %9, %cst_8 {dimension_numbers = #tpu.dot_dimension_numbers<[1], [0], [0], [1], [0, 0, 1, 1], [], []>} : vector<16x128xbf16>, vector<128x128xbf16>, vector<16x128xf32> -> vector<16x128xf32>
    %c0_9 = arith.constant 0 : index
    %c0_10 = arith.constant 0 : index
    %11 = vector.load %arg5[%c0_9, %c0_10] : memref<1x128xf32, #tpu.memory_space<vmem>>, vector<1x128xf32>
    %12 = vector.broadcast %11 : vector<1x128xf32> to vector<16x128xf32>
    %13 = arith.addf %10, %12 : vector<16x128xf32>
    %cst_11 = arith.constant 0.000000e+00 : f32
    %14 = vector.broadcast %cst_11 : f32 to vector<16x128xf32>
    %15 = arith.maximumf %13, %14 : vector<16x128xf32>
    %16 = arith.truncf %15 : vector<16x128xf32> to vector<16x128xbf16>
    %c0_12 = arith.constant 0 : index
    %c0_13 = arith.constant 0 : index
    %17 = vector.load %arg6[%c0_12, %c0_13] : memref<128x128xbf16, #tpu.memory_space<vmem>>, vector<128x128xbf16>
    %cst_14 = arith.constant dense<0.000000e+00> : vector<16x128xf32>
    %18 = tpu.matmul %16, %17, %cst_14 {dimension_numbers = #tpu.dot_dimension_numbers<[1], [0], [0], [1], [0, 0, 1, 1], [], []>} : vector<16x128xbf16>, vector<128x128xbf16>, vector<16x128xf32> -> vector<16x128xf32>
    %c0_15 = arith.constant 0 : index
    %c0_16 = arith.constant 0 : index
    %19 = vector.load %arg7[%c0_15, %c0_16] : memref<1x128xf32, #tpu.memory_space<vmem>>, vector<1x128xf32>
    %20 = vector.broadcast %19 : vector<1x128xf32> to vector<16x128xf32>
    %21 = arith.addf %18, %20 : vector<16x128xf32>
    %cst_17 = arith.constant 0.000000e+00 : f32
    %22 = vector.broadcast %cst_17 : f32 to vector<16x128xf32>
    %23 = arith.maximumf %21, %22 : vector<16x128xf32>
    %24 = arith.truncf %23 : vector<16x128xf32> to vector<16x128xbf16>
    %c0_18 = arith.constant 0 : index
    %c0_19 = arith.constant 0 : index
    %25 = vector.load %arg8[%c0_18, %c0_19] : memref<128x128xbf16, #tpu.memory_space<vmem>>, vector<128x128xbf16>
    %cst_20 = arith.constant dense<0.000000e+00> : vector<16x128xf32>
    %26 = tpu.matmul %24, %25, %cst_20 {dimension_numbers = #tpu.dot_dimension_numbers<[1], [0], [0], [1], [0, 0, 1, 1], [], []>} : vector<16x128xbf16>, vector<128x128xbf16>, vector<16x128xf32> -> vector<16x128xf32>
    %c0_21 = arith.constant 0 : index
    %c0_22 = arith.constant 0 : index
    %27 = vector.load %arg9[%c0_21, %c0_22] : memref<1x128xf32, #tpu.memory_space<vmem>>, vector<1x128xf32>
    %28 = vector.broadcast %27 : vector<1x128xf32> to vector<16x128xf32>
    %29 = arith.addf %26, %28 : vector<16x128xf32>
    %30 = arith.truncf %29 : vector<16x128xf32> to vector<16x128xbf16>
    %c0_23 = arith.constant 0 : index
    %c0_24 = arith.constant 0 : index
    %31 = vector.load %arg10[%c0_23, %c0_24] : memref<128x128xbf16, #tpu.memory_space<vmem>>, vector<128x128xbf16>
    %cst_25 = arith.constant dense<0.000000e+00> : vector<16x128xf32>
    %32 = tpu.matmul %30, %31, %cst_25 {dimension_numbers = #tpu.dot_dimension_numbers<[1], [0], [0], [1], [0, 0, 1, 1], [], []>} : vector<16x128xbf16>, vector<128x128xbf16>, vector<16x128xf32> -> vector<16x128xf32>
    %c0_26 = arith.constant 0 : index
    %c0_27 = arith.constant 0 : index
    %33 = vector.load %arg11[%c0_26, %c0_27] : memref<1x128xf32, #tpu.memory_space<vmem>>, vector<1x128xf32>
    %34 = vector.broadcast %33 : vector<1x128xf32> to vector<16x128xf32>
    %35 = arith.addf %32, %34 : vector<16x128xf32>
    %cst_28 = arith.constant 0.000000e+00 : f32
    %36 = vector.broadcast %cst_28 : f32 to vector<16x128xf32>
    %37 = arith.maximumf %35, %36 : vector<16x128xf32>
    %38 = arith.truncf %37 : vector<16x128xf32> to vector<16x128xbf16>
    %c0_29 = arith.constant 0 : index
    %c0_30 = arith.constant 0 : index
    %39 = vector.load %arg12[%c0_29, %c0_30] : memref<128x128xbf16, #tpu.memory_space<vmem>>, vector<128x128xbf16>
    %cst_31 = arith.constant dense<0.000000e+00> : vector<16x128xf32>
    %40 = tpu.matmul %38, %39, %cst_31 {dimension_numbers = #tpu.dot_dimension_numbers<[1], [0], [0], [1], [0, 0, 1, 1], [], []>} : vector<16x128xbf16>, vector<128x128xbf16>, vector<16x128xf32> -> vector<16x128xf32>
    %c0_32 = arith.constant 0 : index
    %c0_33 = arith.constant 0 : index
    %41 = vector.load %arg13[%c0_32, %c0_33] : memref<1x128xf32, #tpu.memory_space<vmem>>, vector<1x128xf32>
    %42 = vector.broadcast %41 : vector<1x128xf32> to vector<16x128xf32>
    %43 = arith.addf %40, %42 : vector<16x128xf32>
    %cst_34 = arith.constant 0.000000e+00 : f32
    %44 = vector.broadcast %cst_34 : f32 to vector<16x128xf32>
    %45 = arith.maximumf %43, %44 : vector<16x128xf32>
    %46 = arith.truncf %45 : vector<16x128xf32> to vector<16x128xbf16>
    %c0_35 = arith.constant 0 : index
    %c0_36 = arith.constant 0 : index
    %47 = vector.load %arg14[%c0_35, %c0_36] : memref<128x128xbf16, #tpu.memory_space<vmem>>, vector<128x128xbf16>
    %cst_37 = arith.constant dense<0.000000e+00> : vector<16x128xf32>
    %48 = tpu.matmul %46, %47, %cst_37 {dimension_numbers = #tpu.dot_dimension_numbers<[1], [0], [0], [1], [0, 0, 1, 1], [], []>} : vector<16x128xbf16>, vector<128x128xbf16>, vector<16x128xf32> -> vector<16x128xf32>
    %c0_38 = arith.constant 0 : index
    %c0_39 = arith.constant 0 : index
    %49 = vector.load %arg15[%c0_38, %c0_39] : memref<1x128xf32, #tpu.memory_space<vmem>>, vector<1x128xf32>
    %50 = vector.broadcast %49 : vector<1x128xf32> to vector<16x128xf32>
    %51 = arith.addf %48, %50 : vector<16x128xf32>
    %cst_40 = arith.constant 0.000000e+00 : f32
    %52 = vector.broadcast %cst_40 : f32 to vector<16x128xf32>
    %53 = arith.maximumf %51, %52 : vector<16x128xf32>
    %54 = arith.truncf %53 : vector<16x128xf32> to vector<16x128xbf16>
    %c0_41 = arith.constant 0 : index
    %c0_42 = arith.constant 0 : index
    %55 = vector.load %arg16[%c0_41, %c0_42] : memref<128x128xbf16, #tpu.memory_space<vmem>>, vector<128x128xbf16>
    %cst_43 = arith.constant dense<0.000000e+00> : vector<16x128xf32>
    %56 = tpu.matmul %54, %55, %cst_43 {dimension_numbers = #tpu.dot_dimension_numbers<[1], [0], [0], [1], [0, 0, 1, 1], [], []>} : vector<16x128xbf16>, vector<128x128xbf16>, vector<16x128xf32> -> vector<16x128xf32>
    %c0_44 = arith.constant 0 : index
    %c0_45 = arith.constant 0 : index
    %57 = vector.load %arg17[%c0_44, %c0_45] : memref<1x128xf32, #tpu.memory_space<vmem>>, vector<1x128xf32>
    %58 = vector.broadcast %57 : vector<1x128xf32> to vector<16x128xf32>
    %59 = arith.addf %56, %58 : vector<16x128xf32>
    %c0_46 = arith.constant 0 : index
    %c0_47 = arith.constant 0 : index
    %60 = vector.load %arg19[%c0_46, %c0_47] : memref<16x128xf32, #tpu.memory_space<vmem>>, vector<16x128xf32>
    tpu.vector_store %arg19[%c0_46, %c0_47], %29 {strides = array<i32>} : memref<16x128xf32, #tpu.memory_space<vmem>>, vector<16x128xf32>,
    %c0_48 = arith.constant 0 : index
    %c0_49 = arith.constant 0 : index
    %61 = vector.load %arg18[%c0_48, %c0_49] : memref<16x128xf32, #tpu.memory_space<vmem>>, vector<16x128xf32>
    tpu.vector_store %arg18[%c0_48, %c0_49], %59 {strides = array<i32>} : memref<16x128xf32, #tpu.memory_space<vmem>>, vector<16x128xf32>,
    return
  }
  func.func @transform_0(%arg0: i32) -> (i32, i32) {
    %c0_i32 = arith.constant 0 : i32
    %c0_i32_0 = arith.constant 0 : i32
    return %arg0, %c0_i32 : i32, i32
  }
  func.func @transform_1(%arg0: i32) -> (i32, i32) {
    %c0_i32 = arith.constant 0 : i32
    %c0_i32_0 = arith.constant 0 : i32
    %c0_i32_1 = arith.constant 0 : i32
    return %c0_i32, %c0_i32_0 : i32, i32
  }
  func.func @transform_2(%arg0: i32) -> (i32, i32) {
    %c0_i32 = arith.constant 0 : i32
    %c0_i32_0 = arith.constant 0 : i32
    %c0_i32_1 = arith.constant 0 : i32
    return %c0_i32, %c0_i32_0 : i32, i32
  }
  func.func @transform_3(%arg0: i32) -> (i32, i32) {
    %c0_i32 = arith.constant 0 : i32
    %c0_i32_0 = arith.constant 0 : i32
    %c0_i32_1 = arith.constant 0 : i32
    return %c0_i32, %c0_i32_0 : i32, i32
  }
  func.func @transform_4(%arg0: i32) -> (i32, i32) {
    %c0_i32 = arith.constant 0 : i32
    %c0_i32_0 = arith.constant 0 : i32
    %c0_i32_1 = arith.constant 0 : i32
    return %c0_i32, %c0_i32_0 : i32, i32
  }
  func.func @transform_5(%arg0: i32) -> (i32, i32) {
    %c0_i32 = arith.constant 0 : i32
    %c0_i32_0 = arith.constant 0 : i32
    %c0_i32_1 = arith.constant 0 : i32
    return %c0_i32, %c0_i32_0 : i32, i32
  }
  func.func @transform_6(%arg0: i32) -> (i32, i32) {
    %c0_i32 = arith.constant 0 : i32
    %c0_i32_0 = arith.constant 0 : i32
    %c0_i32_1 = arith.constant 0 : i32
    return %c0_i32, %c0_i32_0 : i32, i32
  }
  func.func @transform_7(%arg0: i32) -> (i32, i32) {
    %c0_i32 = arith.constant 0 : i32
    %c0_i32_0 = arith.constant 0 : i32
    %c0_i32_1 = arith.constant 0 : i32
    return %c0_i32, %c0_i32_0 : i32, i32
  }
  func.func @transform_8(%arg0: i32) -> (i32, i32) {
    %c0_i32 = arith.constant 0 : i32
    %c0_i32_0 = arith.constant 0 : i32
    %c0_i32_1 = arith.constant 0 : i32
    return %c0_i32, %c0_i32_0 : i32, i32
  }
  func.func @transform_9(%arg0: i32) -> (i32, i32) {
    %c0_i32 = arith.constant 0 : i32
    %c0_i32_0 = arith.constant 0 : i32
    %c0_i32_1 = arith.constant 0 : i32
    return %c0_i32, %c0_i32_0 : i32, i32
  }
  func.func @transform_10(%arg0: i32) -> (i32, i32) {
    %c0_i32 = arith.constant 0 : i32
    %c0_i32_0 = arith.constant 0 : i32
    %c0_i32_1 = arith.constant 0 : i32
    return %c0_i32, %c0_i32_0 : i32, i32
  }
  func.func @transform_11(%arg0: i32) -> (i32, i32) {
    %c0_i32 = arith.constant 0 : i32
    %c0_i32_0 = arith.constant 0 : i32
    %c0_i32_1 = arith.constant 0 : i32
    return %c0_i32, %c0_i32_0 : i32, i32
  }
  func.func @transform_12(%arg0: i32) -> (i32, i32) {
    %c0_i32 = arith.constant 0 : i32
    %c0_i32_0 = arith.constant 0 : i32
    %c0_i32_1 = arith.constant 0 : i32
    return %c0_i32, %c0_i32_0 : i32, i32
  }
  func.func @transform_13(%arg0: i32) -> (i32, i32) {
    %c0_i32 = arith.constant 0 : i32
    %c0_i32_0 = arith.constant 0 : i32
    %c0_i32_1 = arith.constant 0 : i32
    return %c0_i32, %c0_i32_0 : i32, i32
  }
  func.func @transform_14(%arg0: i32) -> (i32, i32) {
    %c0_i32 = arith.constant 0 : i32
    %c0_i32_0 = arith.constant 0 : i32
    %c0_i32_1 = arith.constant 0 : i32
    return %c0_i32, %c0_i32_0 : i32, i32
  }
  func.func @transform_15(%arg0: i32) -> (i32, i32) {
    %c0_i32 = arith.constant 0 : i32
    %c0_i32_0 = arith.constant 0 : i32
    %c0_i32_1 = arith.constant 0 : i32
    return %c0_i32, %c0_i32_0 : i32, i32
  }
  func.func @transform_16(%arg0: i32) -> (i32, i32) {
    %c0_i32 = arith.constant 0 : i32
    %c0_i32_0 = arith.constant 0 : i32
    %c0_i32_1 = arith.constant 0 : i32
    return %c0_i32, %c0_i32_0 : i32, i32
  }
  func.func @transform_17(%arg0: i32) -> (i32, i32) {
    %c0_i32 = arith.constant 0 : i32
    %c0_i32_0 = arith.constant 0 : i32
    return %arg0, %c0_i32 : i32, i32
  }
  func.func @transform_18(%arg0: i32) -> (i32, i32) {
    %c0_i32 = arith.constant 0 : i32
    %c0_i32_0 = arith.constant 0 : i32
    return %arg0, %c0_i32 : i32, i32
  }
}

</mosaic_0001>

<llo_original>
// kernel: tpu_custom_call.1
$region0: #{tpu_custom_call.1}
  #allocation0 [shape = 'u32[]', space=smem, size = 0x4, offset = 0x4, fixed_abs, tag = 'smem constant byte address 0x4 - core index']
  #allocation1 [shape = 'u32[72,128]{1,0:T(1,128)}', space=vmem, size = 0x9000, scoped, tag = 'internal scratch']
  %s0 = inlined_call_operand.hbm [shape: bf16[16,128], index: 0, kind: input, shape index: {}]
  %s1 = inlined_call_operand.hbm [shape: bf16[128,128], index: 1, kind: input, shape index: {}]
  %s2 = inlined_call_operand.vmem [shape: f32[1,128], index: 2, kind: input, shape index: {}]
  %s3 = inlined_call_operand.hbm [shape: bf16[128,128], index: 3, kind: input, shape index: {}]
  %s4 = inlined_call_operand.vmem [shape: f32[1,128], index: 4, kind: input, shape index: {}]
  %s5 = inlined_call_operand.hbm [shape: bf16[128,128], index: 5, kind: input, shape index: {}]
  %s6 = inlined_call_operand.vmem [shape: f32[1,128], index: 6, kind: input, shape index: {}]
  %s7 = inlined_call_operand.hbm [shape: bf16[128,128], index: 7, kind: input, shape index: {}]
  %s8 = inlined_call_operand.vmem [shape: f32[1,128], index: 8, kind: input, shape index: {}]
  %s9 = inlined_call_operand.hbm [shape: bf16[128,128], index: 9, kind: input, shape index: {}]
  %s10 = inlined_call_operand.vmem [shape: f32[1,128], index: 10, kind: input, shape index: {}]
  %s11 = inlined_call_operand.hbm [shape: bf16[128,128], index: 11, kind: input, shape index: {}]
  %s12 = inlined_call_operand.vmem [shape: f32[1,128], index: 12, kind: input, shape index: {}]
  %s13 = inlined_call_operand.hbm [shape: bf16[128,128], index: 13, kind: input, shape index: {}]
  %s14 = inlined_call_operand.vmem [shape: f32[1,128], index: 14, kind: input, shape index: {}]
  %s15 = inlined_call_operand.hbm [shape: bf16[128,128], index: 15, kind: input, shape index: {}]
  %s16 = inlined_call_operand.vmem [shape: f32[1,128], index: 16, kind: input, shape index: {}]
  %s17 = inlined_call_operand.hbm [shape: f32[16,128], index: 17, kind: output, shape index: {0}]
  %s18 = inlined_call_operand.hbm [shape: f32[16,128], index: 18, kind: output, shape index: {1}]
  %19 = xla_tuple %s17, %s18
  %s20 = sld [smem:[#allocation0]]
  $region122: #{tpu_custom_call.1} parent=0
    _
  %s22 = ssub.s32 1, %s20
  %s23 = scalar_select 0, %s22, %s20
  $region1: #{tpu_custom_call.1} parent=0
    #allocation2 [shape = 'u8[4096]{0}', space=vmem, size = 0x1000, scoped, tag = 'input window, operand 0, single buffered']
    #allocation3 [shape = 's32[1]{0}', space=sflag, size = 0x4, scoped, tag = 'scoped memory for tpu_custom_call.1']
    #allocation4 [shape = 's32[1]{0}', space=sflag, size = 0x4, scoped, tag = 'scoped memory for tpu_custom_call.1']
    #allocation5 [shape = 'u8[32768]{0}', space=vmem, size = 0x8000, scoped, tag = 'input window, operand 1, single buffered']
    #allocation6 [shape = 's32[1]{0}', space=sflag, size = 0x4, scoped, tag = 'scoped memory for tpu_custom_call.1']
    #allocation7 [shape = 'u8[32768]{0}', space=vmem, size = 0x8000, scoped, tag = 'input window, operand 3, single buffered']
    #allocation8 [shape = 'u8[32768]{0}', space=vmem, size = 0x8000, scoped, tag = 'input window, operand 5, single buffered']
    #allocation9 [shape = 's32[1]{0}', space=sflag, size = 0x4, scoped, tag = 'scoped memory for tpu_custom_call.1']
    #allocation10 [shape = 'u8[32768]{0}', space=vmem, size = 0x8000, scoped, tag = 'input window, operand 7, single buffered']
    #allocation11 [shape = 'u8[32768]{0}', space=vmem, size = 0x8000, scoped, tag = 'input window, operand 9, single buffered']
    #allocation12 [shape = 's32[1]{0}', space=sflag, size = 0x4, scoped, tag = 'scoped memory for tpu_custom_call.1']
    #allocation13 [shape = 'u8[32768]{0}', space=vmem, size = 0x8000, scoped, tag = 'input window, operand 11, single buffered']
    #allocation14 [shape = 'u8[32768]{0}', space=vmem, size = 0x8000, scoped, tag = 'input window, operand 13, single buffered']
    #allocation15 [shape = 's32[1]{0}', space=sflag, size = 0x4, scoped, tag = 'scoped memory for tpu_custom_call.1']
    #allocation16 [shape = 'u8[32768]{0}', space=vmem, size = 0x8000, scoped, tag = 'input window, operand 15, single buffered']
    #allocation17 [shape = 'u8[8192]{0}', space=vmem, size = 0x2000, scoped, tag = 'output window, operand 0, single buffered']
    #allocation18 [shape = 'u8[8192]{0}', space=vmem, size = 0x2000, scoped, tag = 'output window, operand 1, single buffered']
    #allocation19 [shape = 's32[1]{0}', space=sflag, size = 0x4, scoped, tag = 'scoped memory for tpu_custom_call.1']
    %24 = vsyncpa [#allocation3], 0
    %25 = vsyncpa [#allocation6], 0
    %26 = vsyncpa [#allocation9], 0
    %27 = vsyncpa [#allocation12], 0
    %28 = vsyncpa [#allocation15], 0
    %29 = vsyncpa [#allocation4], 0
    %30 = vsyncpa [#allocation19], 0
    // Predicated region
    $region2: #{tpu_custom_call.1} parent=1 // pred_check
      _
    $region3: #{tpu_custom_call.1} parent=1 // pred_check_branch
      %32 = sbr.rel (0) target = $region5
    $region4: #{tpu_custom_call.1} parent=1 // pred_region
      %34 = vsyncadd [#allocation3], 0
      %s35 = sshll.u32 %s0, 4
      %s36 = int_to_ptr.hbm [resolvable:$true] %s35
      %s37 = sshll.u32 [#allocation2], 4
      %s38 = int_to_ptr.vmem [resolvable:$true] %s37
      %43 = dma.hbm_to_vmem [thread:$0]  %s36, 128, %s38, [#allocation3], 64, 64, 4
    $region5: #{tpu_custom_call.1} parent=1 // pred_fallthru
      _
    // Predicated region
    $region6: #{tpu_custom_call.1} parent=1 // pred_check
      _
    $region7: #{tpu_custom_call.1} parent=1 // pred_check_branch
      %45 = sbr.rel (0) target = $region9
    $region8: #{tpu_custom_call.1} parent=1 // pred_region
      %47 = vsyncadd [#allocation6], 0
      %s48 = sshll.u32 %s1, 4
      %s49 = int_to_ptr.hbm [resolvable:$true] %s48
      %s50 = sshll.u32 [#allocation5], 4
      %s51 = int_to_ptr.vmem [resolvable:$true] %s50
      %56 = dma.hbm_to_vmem [thread:$0]  %s49, 1024, %s51, [#allocation6], 64, 64, 4
    $region9: #{tpu_custom_call.1} parent=1 // pred_fallthru
      _
    // Predicated region
    $region10: #{tpu_custom_call.1} parent=1 // pred_check
      _
    $region11: #{tpu_custom_call.1} parent=1 // pred_check_branch
      %58 = sbr.rel (0) target = $region13
    $region12: #{tpu_custom_call.1} parent=1 // pred_region
      _
    $region13: #{tpu_custom_call.1} parent=1 // pred_fallthru
      _
    // Predicated region
    $region14: #{tpu_custom_call.1} parent=1 // pred_check
      _
    $region15: #{tpu_custom_call.1} parent=1 // pred_check_branch
      %60 = sbr.rel (0) target = $region17
    $region16: #{tpu_custom_call.1} parent=1 // pred_region
      %62 = vsyncadd [#allocation6], 0
      %s63 = sshll.u32 %s3, 4
      %s64 = int_to_ptr.hbm [resolvable:$true] %s63
      %s65 = sshll.u32 [#allocation7], 4
      %s66 = int_to_ptr.vmem [resolvable:$true] %s65
      %71 = dma.hbm_to_vmem [thread:$0]  %s64, 1024, %s66, [#allocation6], 64, 64, 4
    $region17: #{tpu_custom_call.1} parent=1 // pred_fallthru
      _
    // Predicated region
    $region18: #{tpu_custom_call.1} parent=1 // pred_check
      _
    $region19: #{tpu_custom_call.1} parent=1 // pred_check_branch
      %73 = sbr.rel (0) target = $region21
    $region20: #{tpu_custom_call.1} parent=1 // pred_region
      _
    $region21: #{tpu_custom_call.1} parent=1 // pred_fallthru
      _
    // Predicated region
    $region22: #{tpu_custom_call.1} parent=1 // pred_check
      _
    $region23: #{tpu_custom_call.1} parent=1 // pred_check_branch
      %75 = sbr.rel (0) target = $region25
    $region24: #{tpu_custom_call.1} parent=1 // pred_region
      %77 = vsyncadd [#allocation9], 0
      %s78 = sshll.u32 %s5, 4
      %s79 = int_to_ptr.hbm [resolvable:$true] %s78
      %s80 = sshll.u32 [#allocation8], 4
      %s81 = int_to_ptr.vmem [resolvable:$true] %s80
      %86 = dma.hbm_to_vmem [thread:$0]  %s79, 1024, %s81, [#allocation9], 64, 64, 4
    $region25: #{tpu_custom_call.1} parent=1 // pred_fallthru
      _
    // Predicated region
    $region26: #{tpu_custom_call.1} parent=1 // pred_check
      _
    $region27: #{tpu_custom_call.1} parent=1 // pred_check_branch
      %88 = sbr.rel (0) target = $region29
    $region28: #{tpu_custom_call.1} parent=1 // pred_region
      _
    $region29: #{tpu_custom_call.1} parent=1 // pred_fallthru
      _
    // Predicated region
    $region30: #{tpu_custom_call.1} parent=1 // pred_check
      _
    $region31: #{tpu_custom_call.1} parent=1 // pred_check_branch
      %90 = sbr.rel (0) target = $region33
    $region32: #{tpu_custom_call.1} parent=1 // pred_region
      %92 = vsyncadd [#allocation9], 0
      %s93 = sshll.u32 %s7, 4
      %s94 = int_to_ptr.hbm [resolvable:$true] %s93
      %s95 = sshll.u32 [#allocation10], 4
      %s96 = int_to_ptr.vmem [resolvable:$true] %s95
      %101 = dma.hbm_to_vmem [thread:$0]  %s94, 1024, %s96, [#allocation9], 64, 64, 4
    $region33: #{tpu_custom_call.1} parent=1 // pred_fallthru
      _
    // Predicated region
    $region34: #{tpu_custom_call.1} parent=1 // pred_check
      _
    $region35: #{tpu_custom_call.1} parent=1 // pred_check_branch
      %103 = sbr.rel (0) target = $region37
    $region36: #{tpu_custom_call.1} parent=1 // pred_region
      _
    $region37: #{tpu_custom_call.1} parent=1 // pred_fallthru
      _
    // Predicated region
    $region38: #{tpu_custom_call.1} parent=1 // pred_check
      _
    $region39: #{tpu_custom_call.1} parent=1 // pred_check_branch
      %105 = sbr.rel (0) target = $region41
    $region40: #{tpu_custom_call.1} parent=1 // pred_region
      %107 = vsyncadd [#allocation12], 0
      %s108 = sshll.u32 %s9, 4
      %s109 = int_to_ptr.hbm [resolvable:$true] %s108
      %s110 = sshll.u32 [#allocation11], 4
      %s111 = int_to_ptr.vmem [resolvable:$true] %s110
      %116 = dma.hbm_to_vmem [thread:$0]  %s109, 1024, %s111, [#allocation12], 64, 64, 4
    $region41: #{tpu_custom_call.1} parent=1 // pred_fallthru
      _
    // Predicated region
    $region42: #{tpu_custom_call.1} parent=1 // pred_check
      _
    $region43: #{tpu_custom_call.1} parent=1 // pred_check_branch
      %118 = sbr.rel (0) target = $region45
    $region44: #{tpu_custom_call.1} parent=1 // pred_region
      _
    $region45: #{tpu_custom_call.1} parent=1 // pred_fallthru
      _
    // Predicated region
    $region46: #{tpu_custom_call.1} parent=1 // pred_check
      _
    $region47: #{tpu_custom_call.1} parent=1 // pred_check_branch
      %120 = sbr.rel (0) target = $region49
    $region48: #{tpu_custom_call.1} parent=1 // pred_region
      %122 = vsyncadd [#allocation12], 0
      %s123 = sshll.u32 %s11, 4
      %s124 = int_to_ptr.hbm [resolvable:$true] %s123
      %s125 = sshll.u32 [#allocation13], 4
      %s126 = int_to_ptr.vmem [resolvable:$true] %s125
      %131 = dma.hbm_to_vmem [thread:$0]  %s124, 1024, %s126, [#allocation12], 64, 64, 4
    $region49: #{tpu_custom_call.1} parent=1 // pred_fallthru
      _
    // Predicated region
    $region50: #{tpu_custom_call.1} parent=1 // pred_check
      _
    $region51: #{tpu_custom_call.1} parent=1 // pred_check_branch
      %133 = sbr.rel (0) target = $region53
    $region52: #{tpu_custom_call.1} parent=1 // pred_region
      _
    $region53: #{tpu_custom_call.1} parent=1 // pred_fallthru
      _
    // Predicated region
    $region54: #{tpu_custom_call.1} parent=1 // pred_check
      _
    $region55: #{tpu_custom_call.1} parent=1 // pred_check_branch
      %135 = sbr.rel (0) target = $region57
    $region56: #{tpu_custom_call.1} parent=1 // pred_region
      %137 = vsyncadd [#allocation15], 0
      %s138 = sshll.u32 %s13, 4
      %s139 = int_to_ptr.hbm [resolvable:$true] %s138
      %s140 = sshll.u32 [#allocation14], 4
      %s141 = int_to_ptr.vmem [resolvable:$true] %s140
      %146 = dma.hbm_to_vmem [thread:$0]  %s139, 1024, %s141, [#allocation15], 64, 64, 4
    $region57: #{tpu_custom_call.1} parent=1 // pred_fallthru
      _
    // Predicated region
    $region58: #{tpu_custom_call.1} parent=1 // pred_check
      _
    $region59: #{tpu_custom_call.1} parent=1 // pred_check_branch
      %148 = sbr.rel (0) target = $region61
    $region60: #{tpu_custom_call.1} parent=1 // pred_region
      _
    $region61: #{tpu_custom_call.1} parent=1 // pred_fallthru
      _
    // Predicated region
    $region62: #{tpu_custom_call.1} parent=1 // pred_check
      _
    $region63: #{tpu_custom_call.1} parent=1 // pred_check_branch
      %150 = sbr.rel (0) target = $region65
    $region64: #{tpu_custom_call.1} parent=1 // pred_region
      %152 = vsyncadd [#allocation15], 0
      %s153 = sshll.u32 %s15, 4
      %s154 = int_to_ptr.hbm [resolvable:$true] %s153
      %s155 = sshll.u32 [#allocation16], 4
      %s156 = int_to_ptr.vmem [resolvable:$true] %s155
      %161 = dma.hbm_to_vmem [thread:$0]  %s154, 1024, %s156, [#allocation15], 64, 64, 4
    $region65: #{tpu_custom_call.1} parent=1 // pred_fallthru
      _
    // Predicated region
    $region66: #{tpu_custom_call.1} parent=1 // pred_check
      _
    $region67: #{tpu_custom_call.1} parent=1 // pred_check_branch
      %163 = sbr.rel (0) target = $region69
    $region68: #{tpu_custom_call.1} parent=1 // pred_region
      _
    $region69: #{tpu_custom_call.1} parent=1 // pred_fallthru
      _
    // Predicated region
    $region70: #{tpu_custom_call.1} parent=1 // pred_check
      _
    $region71: #{tpu_custom_call.1} parent=1 // pred_check_branch
      %165 = sbr.rel (0) target = $region73
    $region72: #{tpu_custom_call.1} parent=1 // pred_region
      %167 = dma.done [#allocation3], 128
    $region73: #{tpu_custom_call.1} parent=1 // pred_fallthru
      _
    // Predicated region
    $region74: #{tpu_custom_call.1} parent=1 // pred_check
      _
    $region75: #{tpu_custom_call.1} parent=1 // pred_check_branch
      %169 = sbr.rel (0) target = $region77
    $region76: #{tpu_custom_call.1} parent=1 // pred_region
      %171 = dma.done [#allocation6], 1024
    $region77: #{tpu_custom_call.1} parent=1 // pred_fallthru
      _
    // Predicated region
    $region78: #{tpu_custom_call.1} parent=1 // pred_check
      _
    $region79: #{tpu_custom_call.1} parent=1 // pred_check_branch
      %173 = sbr.rel (0) target = $region81
    $region80: #{tpu_custom_call.1} parent=1 // pred_region
      %175 = dma.done [#allocation6], 1024
    $region81: #{tpu_custom_call.1} parent=1 // pred_fallthru
      _
    // Predicated region
    $region82: #{tpu_custom_call.1} parent=1 // pred_check
      _
    $region83: #{tpu_custom_call.1} parent=1 // pred_check_branch
      %177 = sbr.rel (0) target = $region85
    $region84: #{tpu_custom_call.1} parent=1 // pred_region
      %179 = dma.done [#allocation9], 1024
    $region85: #{tpu_custom_call.1} parent=1 // pred_fallthru
      _
    // Predicated region
    $region86: #{tpu_custom_call.1} parent=1 // pred_check
      _
    $region87: #{tpu_custom_call.1} parent=1 // pred_check_branch
      %181 = sbr.rel (0) target = $region89
    $region88: #{tpu_custom_call.1} parent=1 // pred_region
      %183 = dma.done [#allocation9], 1024
    $region89: #{tpu_custom_call.1} parent=1 // pred_fallthru
      _
    // Predicated region
    $region90: #{tpu_custom_call.1} parent=1 // pred_check
      _
    $region91: #{tpu_custom_call.1} parent=1 // pred_check_branch
      %185 = sbr.rel (0) target = $region93
    $region92: #{tpu_custom_call.1} parent=1 // pred_region
      %187 = dma.done [#allocation12], 1024
    $region93: #{tpu_custom_call.1} parent=1 // pred_fallthru
      _
    // Predicated region
    $region94: #{tpu_custom_call.1} parent=1 // pred_check
      _
    $region95: #{tpu_custom_call.1} parent=1 // pred_check_branch
      %189 = sbr.rel (0) target = $region97
    $region96: #{tpu_custom_call.1} parent=1 // pred_region
      %191 = dma.done [#allocation12], 1024
    $region97: #{tpu_custom_call.1} parent=1 // pred_fallthru
      _
    // Predicated region
    $region98: #{tpu_custom_call.1} parent=1 // pred_check
      _
    $region99: #{tpu_custom_call.1} parent=1 // pred_check_branch
      %193 = sbr.rel (0) target = $region101
    $region100: #{tpu_custom_call.1} parent=1 // pred_region
      %195 = dma.done [#allocation15], 1024
    $region101: #{tpu_custom_call.1} parent=1 // pred_fallthru
      _
    // Predicated region
    $region102: #{tpu_custom_call.1} parent=1 // pred_check
      _
    $region103: #{tpu_custom_call.1} parent=1 // pred_check_branch
      %197 = sbr.rel (0) target = $region105
    $region104: #{tpu_custom_call.1} parent=1 // pred_region
      %199 = dma.done [#allocation15], 1024
    $region105: #{tpu_custom_call.1} parent=1 // pred_fallthru
      _
    %v200 = vld [vmem:[#allocation2] sm:$0xf]
    %v201 = vld [vmem:[#allocation2 + $0x4] sm:$0xf]
    %v202 = vld [vmem:[#allocation5] sm:$0xf]
    %v203 = vld [vmem:[#allocation5 + $0x4] sm:$0xf]
    %v204 = vld [vmem:[#allocation5 + $0x8] sm:$0xf]
    %v205 = vld [vmem:[#allocation5 + $0xc] sm:$0xf]
    %v206 = vld [vmem:[#allocation5 + $0x10] sm:$0xf]
    %v207 = vld [vmem:[#allocation5 + $0x14] sm:$0xf]
    %v208 = vld [vmem:[#allocation5 + $0x18] sm:$0xf]
    %v209 = vld [vmem:[#allocation5 + $0x1c] sm:$0xf]
    %v210 = vld [vmem:[#allocation5 + $0x20] sm:$0xf]
    %v211 = vld [vmem:[#allocation5 + $0x24] sm:$0xf]
    %v212 = vld [vmem:[#allocation5 + $0x28] sm:$0xf]
    %v213 = vld [vmem:[#allocation5 + $0x2c] sm:$0xf]
    %v214 = vld [vmem:[#allocation5 + $0x30] sm:$0xf]
    %v215 = vld [vmem:[#allocation5 + $0x34] sm:$0xf]
    %v216 = vld [vmem:[#allocation5 + $0x38] sm:$0xf]
    %v217 = vld [vmem:[#allocation5 + $0x3c] sm:$0xf]
    %v218 = vld [vmem:[%s2] sm:$0x1]
    %v220 = vperm.slane %v218, 0
    %v224 = vunpack.c.l.b16 %v200
    %v225 = vunpack.c.l.b16 %v201
    %v226 = vpack.c.b16 %v225, %v224
    %v244 = vunpack.c.l.b16 %v202
    %v245 = vunpack.c.l.b16 %v203
    %v246 = vunpack.c.l.b16 %v204
    %v247 = vunpack.c.l.b16 %v205
    %v248 = vunpack.c.l.b16 %v206
    %v249 = vunpack.c.l.b16 %v207
    %v250 = vunpack.c.l.b16 %v208
    %v251 = vunpack.c.l.b16 %v209
    %v252 = vunpack.c.l.b16 %v210
    %v253 = vunpack.c.l.b16 %v211
    %v254 = vunpack.c.l.b16 %v212
    %v255 = vunpack.c.l.b16 %v213
    %v256 = vunpack.c.l.b16 %v214
    %v257 = vunpack.c.l.b16 %v215
    %v258 = vunpack.c.l.b16 %v216
    %v259 = vunpack.c.l.b16 %v217
    %v260 = vpack.c.b16 %v245, %v244
    %v261 = vpack.c.b16 %v247, %v246
    %v262 = vpack.c.b16 %v249, %v248
    %v263 = vpack.c.b16 %v251, %v250
    %v264 = vpack.c.b16 %v253, %v252
    %v265 = vpack.c.b16 %v255, %v254
    %v266 = vpack.c.b16 %v257, %v256
    %v267 = vpack.c.b16 %v259, %v258
    %276 = vmatpush.bf16.msra.mxu0 %v267
    %277 = vmatpush.bf16.msra.mxu0 %v266
    %278 = vmatpush.bf16.msra.mxu0 %v265
    %279 = vmatpush.bf16.msra.mxu0 %v264
    %280 = vmatpush.bf16.msra.mxu0 %v263
    %281 = vmatpush.bf16.msra.mxu0 %v262
    %282 = vmatpush.bf16.msra.mxu0 %v261
    %283 = vmatpush.bf16.msra.mxu0 %v260
    %284 = vmatmul.bf16.gmra.mxu0 %v226
    %v285 = vpop.f32.mrf.mxu0
    %v286 = vadd.f32 %v220, %v285
    %v287 = vpop.f32.mrf.mxu0
    %v288 = vadd.f32 %v220, %v287
    %289 = vdwg.mxu0
    %v290 = vmax.f32 %v286, 0.0
    %v291 = vmax.f32 %v288, 0.0
    %v292 = vpack.c.bf16 %v291, %v290
    %v293 = vld [vmem:[#allocation7] sm:$0xf]
    %v294 = vld [vmem:[#allocation7 + $0x4] sm:$0xf]
    %v295 = vld [vmem:[#allocation7 + $0x8] sm:$0xf]
    %v296 = vld [vmem:[#allocation7 + $0xc] sm:$0xf]
    %v297 = vld [vmem:[#allocation7 + $0x10] sm:$0xf]
    %v298 = vld [vmem:[#allocation7 + $0x14] sm:$0xf]
    %v299 = vld [vmem:[#allocation7 + $0x18] sm:$0xf]
    %v300 = vld [vmem:[#allocation7 + $0x1c] sm:$0xf]
    %v301 = vld [vmem:[#allocation7 + $0x20] sm:$0xf]
    %v302 = vld [vmem:[#allocation7 + $0x24] sm:$0xf]
    %v303 = vld [vmem:[#allocation7 + $0x28] sm:$0xf]
    %v304 = vld [vmem:[#allocation7 + $0x2c] sm:$0xf]
    %v305 = vld [vmem:[#allocation7 + $0x30] sm:$0xf]
    %v306 = vld [vmem:[#allocation7 + $0x34] sm:$0xf]
    %v307 = vld [vmem:[#allocation7 + $0x38] sm:$0xf]
    %v308 = vld [vmem:[#allocation7 + $0x3c] sm:$0xf]
    %v309 = vld [vmem:[%s4] sm:$0x1]
    %v311 = vperm.slane %v309, 0
    %v329 = vunpack.c.l.b16 %v293
    %v330 = vunpack.c.l.b16 %v294
    %v331 = vunpack.c.l.b16 %v295
    %v332 = vunpack.c.l.b16 %v296
    %v333 = vunpack.c.l.b16 %v297
    %v334 = vunpack.c.l.b16 %v298
    %v335 = vunpack.c.l.b16 %v299
    %v336 = vunpack.c.l.b16 %v300
    %v337 = vunpack.c.l.b16 %v301
    %v338 = vunpack.c.l.b16 %v302
    %v339 = vunpack.c.l.b16 %v303
    %v340 = vunpack.c.l.b16 %v304
    %v341 = vunpack.c.l.b16 %v305
    %v342 = vunpack.c.l.b16 %v306
    %v343 = vunpack.c.l.b16 %v307
    %v344 = vunpack.c.l.b16 %v308
    %v345 = vpack.c.b16 %v330, %v329
    %v346 = vpack.c.b16 %v332, %v331
    %v347 = vpack.c.b16 %v334, %v333
    %v348 = vpack.c.b16 %v336, %v335
    %v349 = vpack.c.b16 %v338, %v337
    %v350 = vpack.c.b16 %v340, %v339
    %v351 = vpack.c.b16 %v342, %v341
    %v352 = vpack.c.b16 %v344, %v343
    %361 = vmatpush.bf16.msra.mxu0 %v352
    %362 = vmatpush.bf16.msra.mxu0 %v351
    %363 = vmatpush.bf16.msra.mxu0 %v350
    %364 = vmatpush.bf16.msra.mxu0 %v349
    %365 = vmatpush.bf16.msra.mxu0 %v348
    %366 = vmatpush.bf16.msra.mxu0 %v347
    %367 = vmatpush.bf16.msra.mxu0 %v346
    %368 = vmatpush.bf16.msra.mxu0 %v345
    %369 = vmatmul.bf16.gmra.mxu0 %v292
    %v370 = vpop.f32.mrf.mxu0
    %v371 = vadd.f32 %v311, %v370
    %v372 = vpop.f32.mrf.mxu0
    %v373 = vadd.f32 %v311, %v372
    %374 = vdwg.mxu0
    %v375 = vmax.f32 %v371, 0.0
    %v376 = vmax.f32 %v373, 0.0
    %v377 = vpack.c.bf16 %v376, %v375
    %v378 = vld [vmem:[#allocation8] sm:$0xf]
    %v379 = vld [vmem:[#allocation8 + $0x4] sm:$0xf]
    %v380 = vld [vmem:[#allocation8 + $0x8] sm:$0xf]
    %v381 = vld [vmem:[#allocation8 + $0xc] sm:$0xf]
    %v382 = vld [vmem:[#allocation8 + $0x10] sm:$0xf]
    %v383 = vld [vmem:[#allocation8 + $0x14] sm:$0xf]
    %v384 = vld [vmem:[#allocation8 + $0x18] sm:$0xf]
    %v385 = vld [vmem:[#allocation8 + $0x1c] sm:$0xf]
    %v386 = vld [vmem:[#allocation8 + $0x20] sm:$0xf]
    %v387 = vld [vmem:[#allocation8 + $0x24] sm:$0xf]
    %v388 = vld [vmem:[#allocation8 + $0x28] sm:$0xf]
    %v389 = vld [vmem:[#allocation8 + $0x2c] sm:$0xf]
    %v390 = vld [vmem:[#allocation8 + $0x30] sm:$0xf]
    %v391 = vld [vmem:[#allocation8 + $0x34] sm:$0xf]
    %v392 = vld [vmem:[#allocation8 + $0x38] sm:$0xf]
    %v393 = vld [vmem:[#allocation8 + $0x3c] sm:$0xf]
    %v394 = vld [vmem:[%s6] sm:$0x1]
    %v396 = vperm.slane %v394, 0
    %v414 = vunpack.c.l.b16 %v378
    %v415 = vunpack.c.l.b16 %v379
    %v416 = vunpack.c.l.b16 %v380
    %v417 = vunpack.c.l.b16 %v381
    %v418 = vunpack.c.l.b16 %v382
    %v419 = vunpack.c.l.b16 %v383
    %v420 = vunpack.c.l.b16 %v384
    %v421 = vunpack.c.l.b16 %v385
    %v422 = vunpack.c.l.b16 %v386
    %v423 = vunpack.c.l.b16 %v387
    %v424 = vunpack.c.l.b16 %v388
    %v425 = vunpack.c.l.b16 %v389
    %v426 = vunpack.c.l.b16 %v390
    %v427 = vunpack.c.l.b16 %v391
    %v428 = vunpack.c.l.b16 %v392
    %v429 = vunpack.c.l.b16 %v393
    %v430 = vpack.c.b16 %v415, %v414
    %v431 = vpack.c.b16 %v417, %v416
    %v432 = vpack.c.b16 %v419, %v418
    %v433 = vpack.c.b16 %v421, %v420
    %v434 = vpack.c.b16 %v423, %v422
    %v435 = vpack.c.b16 %v425, %v424
    %v436 = vpack.c.b16 %v427, %v426
    %v437 = vpack.c.b16 %v429, %v428
    %446 = vmatpush.bf16.msra.mxu0 %v437
    %447 = vmatpush.bf16.msra.mxu0 %v436
    %448 = vmatpush.bf16.msra.mxu0 %v435
    %449 = vmatpush.bf16.msra.mxu0 %v434
    %450 = vmatpush.bf16.msra.mxu0 %v433
    %451 = vmatpush.bf16.msra.mxu0 %v432
    %452 = vmatpush.bf16.msra.mxu0 %v431
    %453 = vmatpush.bf16.msra.mxu0 %v430
    %454 = vmatmul.bf16.gmra.mxu0 %v377
    %v455 = vpop.f32.mrf.mxu0
    %v456 = vadd.f32 %v396, %v455
    %v457 = vpop.f32.mrf.mxu0
    %v458 = vadd.f32 %v396, %v457
    %459 = vdwg.mxu0
    %v460 = vmax.f32 %v456, 0.0
    %v461 = vmax.f32 %v458, 0.0
    %v462 = vpack.c.bf16 %v461, %v460
    %v463 = vld [vmem:[#allocation10] sm:$0xf]
    %v464 = vld [vmem:[#allocation10 + $0x4] sm:$0xf]
    %v465 = vld [vmem:[#allocation10 + $0x8] sm:$0xf]
    %v466 = vld [vmem:[#allocation10 + $0xc] sm:$0xf]
    %v467 = vld [vmem:[#allocation10 + $0x10] sm:$0xf]
    %v468 = vld [vmem:[#allocation10 + $0x14] sm:$0xf]
    %v469 = vld [vmem:[#allocation10 + $0x18] sm:$0xf]
    %v470 = vld [vmem:[#allocation10 + $0x1c] sm:$0xf]
    %v471 = vld [vmem:[#allocation10 + $0x20] sm:$0xf]
    %v472 = vld [vmem:[#allocation10 + $0x24] sm:$0xf]
    %v473 = vld [vmem:[#allocation10 + $0x28] sm:$0xf]
    %v474 = vld [vmem:[#allocation10 + $0x2c] sm:$0xf]
    %v475 = vld [vmem:[#allocation10 + $0x30] sm:$0xf]
    %v476 = vld [vmem:[#allocation10 + $0x34] sm:$0xf]
    %v477 = vld [vmem:[#allocation10 + $0x38] sm:$0xf]
    %v478 = vld [vmem:[#allocation10 + $0x3c] sm:$0xf]
    %v479 = vld [vmem:[%s8] sm:$0x1]
    %v481 = vperm.slane %v479, 0
    %v499 = vunpack.c.l.b16 %v463
    %v500 = vunpack.c.l.b16 %v464
    %v501 = vunpack.c.l.b16 %v465
    %v502 = vunpack.c.l.b16 %v466
    %v503 = vunpack.c.l.b16 %v467
    %v504 = vunpack.c.l.b16 %v468
    %v505 = vunpack.c.l.b16 %v469
    %v506 = vunpack.c.l.b16 %v470
    %v507 = vunpack.c.l.b16 %v471
    %v508 = vunpack.c.l.b16 %v472
    %v509 = vunpack.c.l.b16 %v473
    %v510 = vunpack.c.l.b16 %v474
    %v511 = vunpack.c.l.b16 %v475
    %v512 = vunpack.c.l.b16 %v476
    %v513 = vunpack.c.l.b16 %v477
    %v514 = vunpack.c.l.b16 %v478
    %v515 = vpack.c.b16 %v500, %v499
    %v516 = vpack.c.b16 %v502, %v501
    %v517 = vpack.c.b16 %v504, %v503
    %v518 = vpack.c.b16 %v506, %v505
    %v519 = vpack.c.b16 %v508, %v507
    %v520 = vpack.c.b16 %v510, %v509
    %v521 = vpack.c.b16 %v512, %v511
    %v522 = vpack.c.b16 %v514, %v513
    %531 = vmatpush.bf16.msra.mxu0 %v522
    %532 = vmatpush.bf16.msra.mxu0 %v521
    %533 = vmatpush.bf16.msra.mxu0 %v520
    %534 = vmatpush.bf16.msra.mxu0 %v519
    %535 = vmatpush.bf16.msra.mxu0 %v518
    %536 = vmatpush.bf16.msra.mxu0 %v517
    %537 = vmatpush.bf16.msra.mxu0 %v516
    %538 = vmatpush.bf16.msra.mxu0 %v515
    %539 = vmatmul.bf16.gmra.mxu0 %v462
    %v540 = vpop.f32.mrf.mxu0
    %v541 = vadd.f32 %v481, %v540
    %v542 = vpop.f32.mrf.mxu0
    %v543 = vadd.f32 %v481, %v542
    %544 = vdwg.mxu0
    %v545 = vpack.c.bf16 %v543, %v541
    %v546 = vld [vmem:[#allocation11] sm:$0xf]
    %v547 = vld [vmem:[#allocation11 + $0x4] sm:$0xf]
    %v548 = vld [vmem:[#allocation11 + $0x8] sm:$0xf]
    %v549 = vld [vmem:[#allocation11 + $0xc] sm:$0xf]
    %v550 = vld [vmem:[#allocation11 + $0x10] sm:$0xf]
    %v551 = vld [vmem:[#allocation11 + $0x14] sm:$0xf]
    %v552 = vld [vmem:[#allocation11 + $0x18] sm:$0xf]
    %v553 = vld [vmem:[#allocation11 + $0x1c] sm:$0xf]
    %v554 = vld [vmem:[#allocation11 + $0x20] sm:$0xf]
    %v555 = vld [vmem:[#allocation11 + $0x24] sm:$0xf]
    %v556 = vld [vmem:[#allocation11 + $0x28] sm:$0xf]
    %v557 = vld [vmem:[#allocation11 + $0x2c] sm:$0xf]
    %v558 = vld [vmem:[#allocation11 + $0x30] sm:$0xf]
    %v559 = vld [vmem:[#allocation11 + $0x34] sm:$0xf]
    %v560 = vld [vmem:[#allocation11 + $0x38] sm:$0xf]
    %v561 = vld [vmem:[#allocation11 + $0x3c] sm:$0xf]
    %v562 = vld [vmem:[%s10] sm:$0x1]
    %v564 = vperm.slane %v562, 0
    %v582 = vunpack.c.l.b16 %v546
    %v583 = vunpack.c.l.b16 %v547
    %v584 = vunpack.c.l.b16 %v548
    %v585 = vunpack.c.l.b16 %v549
    %v586 = vunpack.c.l.b16 %v550
    %v587 = vunpack.c.l.b16 %v551
    %v588 = vunpack.c.l.b16 %v552
    %v589 = vunpack.c.l.b16 %v553
    %v590 = vunpack.c.l.b16 %v554
    %v591 = vunpack.c.l.b16 %v555
    %v592 = vunpack.c.l.b16 %v556
    %v593 = vunpack.c.l.b16 %v557
    %v594 = vunpack.c.l.b16 %v558
    %v595 = vunpack.c.l.b16 %v559
    %v596 = vunpack.c.l.b16 %v560
    %v597 = vunpack.c.l.b16 %v561
    %v598 = vpack.c.b16 %v583, %v582
    %v599 = vpack.c.b16 %v585, %v584
    %v600 = vpack.c.b16 %v587, %v586
    %v601 = vpack.c.b16 %v589, %v588
    %v602 = vpack.c.b16 %v591, %v590
    %v603 = vpack.c.b16 %v593, %v592
    %v604 = vpack.c.b16 %v595, %v594
    %v605 = vpack.c.b16 %v597, %v596
    %614 = vmatpush.bf16.msra.mxu0 %v605
    %615 = vmatpush.bf16.msra.mxu0 %v604
    %616 = vmatpush.bf16.msra.mxu0 %v603
    %617 = vmatpush.bf16.msra.mxu0 %v602
    %618 = vmatpush.bf16.msra.mxu0 %v601
    %619 = vmatpush.bf16.msra.mxu0 %v600
    %620 = vmatpush.bf16.msra.mxu0 %v599
    %621 = vmatpush.bf16.msra.mxu0 %v598
    %622 = vmatmul.bf16.gmra.mxu0 %v545
    %v623 = vpop.f32.mrf.mxu0
    %v624 = vadd.f32 %v564, %v623
    %v625 = vpop.f32.mrf.mxu0
    %v626 = vadd.f32 %v564, %v625
    %627 = vdwg.mxu0
    %v628 = vmax.f32 %v624, 0.0
    %v629 = vmax.f32 %v626, 0.0
    %v630 = vpack.c.bf16 %v629, %v628
    %v631 = vld [vmem:[#allocation13] sm:$0xf]
    %v632 = vld [vmem:[#allocation13 + $0x4] sm:$0xf]
    %v633 = vld [vmem:[#allocation13 + $0x8] sm:$0xf]
    %v634 = vld [vmem:[#allocation13 + $0xc] sm:$0xf]
    %v635 = vld [vmem:[#allocation13 + $0x10] sm:$0xf]
    %v636 = vld [vmem:[#allocation13 + $0x14] sm:$0xf]
    %v637 = vld [vmem:[#allocation13 + $0x18] sm:$0xf]
    %v638 = vld [vmem:[#allocation13 + $0x1c] sm:$0xf]
    %v639 = vld [vmem:[#allocation13 + $0x20] sm:$0xf]
    %v640 = vld [vmem:[#allocation13 + $0x24] sm:$0xf]
    %v641 = vld [vmem:[#allocation13 + $0x28] sm:$0xf]
    %v642 = vld [vmem:[#allocation13 + $0x2c] sm:$0xf]
    %v643 = vld [vmem:[#allocation13 + $0x30] sm:$0xf]
    %v644 = vld [vmem:[#allocation13 + $0x34] sm:$0xf]
    %v645 = vld [vmem:[#allocation13 + $0x38] sm:$0xf]
    %v646 = vld [vmem:[#allocation13 + $0x3c] sm:$0xf]
    %v647 = vld [vmem:[%s12] sm:$0x1]
    %v649 = vperm.slane %v647, 0
    %v667 = vunpack.c.l.b16 %v631
    %v668 = vunpack.c.l.b16 %v632
    %v669 = vunpack.c.l.b16 %v633
    %v670 = vunpack.c.l.b16 %v634
    %v671 = vunpack.c.l.b16 %v635
    %v672 = vunpack.c.l.b16 %v636
    %v673 = vunpack.c.l.b16 %v637
    %v674 = vunpack.c.l.b16 %v638
    %v675 = vunpack.c.l.b16 %v639
    %v676 = vunpack.c.l.b16 %v640
    %v677 = vunpack.c.l.b16 %v641
    %v678 = vunpack.c.l.b16 %v642
    %v679 = vunpack.c.l.b16 %v643
    %v680 = vunpack.c.l.b16 %v644
    %v681 = vunpack.c.l.b16 %v645
    %v682 = vunpack.c.l.b16 %v646
    %v683 = vpack.c.b16 %v668, %v667
    %v684 = vpack.c.b16 %v670, %v669
    %v685 = vpack.c.b16 %v672, %v671
    %v686 = vpack.c.b16 %v674, %v673
    %v687 = vpack.c.b16 %v676, %v675
    %v688 = vpack.c.b16 %v678, %v677
    %v689 = vpack.c.b16 %v680, %v679
    %v690 = vpack.c.b16 %v682, %v681
    %699 = vmatpush.bf16.msra.mxu0 %v690
    %700 = vmatpush.bf16.msra.mxu0 %v689
    %701 = vmatpush.bf16.msra.mxu0 %v688
    %702 = vmatpush.bf16.msra.mxu0 %v687
    %703 = vmatpush.bf16.msra.mxu0 %v686
    %704 = vmatpush.bf16.msra.mxu0 %v685
    %705 = vmatpush.bf16.msra.mxu0 %v684
    %706 = vmatpush.bf16.msra.mxu0 %v683
    %707 = vmatmul.bf16.gmra.mxu0 %v630
    %v708 = vpop.f32.mrf.mxu0
    %v709 = vadd.f32 %v649, %v708
    %v710 = vpop.f32.mrf.mxu0
    %v711 = vadd.f32 %v649, %v710
    %712 = vdwg.mxu0
    %v713 = vmax.f32 %v709, 0.0
    %v714 = vmax.f32 %v711, 0.0
    %v715 = vpack.c.bf16 %v714, %v713
    %v716 = vld [vmem:[#allocation14] sm:$0xf]
    %v717 = vld [vmem:[#allocation14 + $0x4] sm:$0xf]
    %v718 = vld [vmem:[#allocation14 + $0x8] sm:$0xf]
    %v719 = vld [vmem:[#allocation14 + $0xc] sm:$0xf]
    %v720 = vld [vmem:[#allocation14 + $0x10] sm:$0xf]
    %v721 = vld [vmem:[#allocation14 + $0x14] sm:$0xf]
    %v722 = vld [vmem:[#allocation14 + $0x18] sm:$0xf]
    %v723 = vld [vmem:[#allocation14 + $0x1c] sm:$0xf]
    %v724 = vld [vmem:[#allocation14 + $0x20] sm:$0xf]
    %v725 = vld [vmem:[#allocation14 + $0x24] sm:$0xf]
    %v726 = vld [vmem:[#allocation14 + $0x28] sm:$0xf]
    %v727 = vld [vmem:[#allocation14 + $0x2c] sm:$0xf]
    %v728 = vld [vmem:[#allocation14 + $0x30] sm:$0xf]
    %v729 = vld [vmem:[#allocation14 + $0x34] sm:$0xf]
    %v730 = vld [vmem:[#allocation14 + $0x38] sm:$0xf]
    %v731 = vld [vmem:[#allocation14 + $0x3c] sm:$0xf]
    %v732 = vld [vmem:[%s14] sm:$0x1]
    %v734 = vperm.slane %v732, 0
    %v752 = vunpack.c.l.b16 %v716
    %v753 = vunpack.c.l.b16 %v717
    %v754 = vunpack.c.l.b16 %v718
    %v755 = vunpack.c.l.b16 %v719
    %v756 = vunpack.c.l.b16 %v720
    %v757 = vunpack.c.l.b16 %v721
    %v758 = vunpack.c.l.b16 %v722
    %v759 = vunpack.c.l.b16 %v723
    %v760 = vunpack.c.l.b16 %v724
    %v761 = vunpack.c.l.b16 %v725
    %v762 = vunpack.c.l.b16 %v726
    %v763 = vunpack.c.l.b16 %v727
    %v764 = vunpack.c.l.b16 %v728
    %v765 = vunpack.c.l.b16 %v729
    %v766 = vunpack.c.l.b16 %v730
    %v767 = vunpack.c.l.b16 %v731
    %v768 = vpack.c.b16 %v753, %v752
    %v769 = vpack.c.b16 %v755, %v754
    %v770 = vpack.c.b16 %v757, %v756
    %v771 = vpack.c.b16 %v759, %v758
    %v772 = vpack.c.b16 %v761, %v760
    %v773 = vpack.c.b16 %v763, %v762
    %v774 = vpack.c.b16 %v765, %v764
    %v775 = vpack.c.b16 %v767, %v766
    %784 = vmatpush.bf16.msra.mxu0 %v775
    %785 = vmatpush.bf16.msra.mxu0 %v774
    %786 = vmatpush.bf16.msra.mxu0 %v773
    %787 = vmatpush.bf16.msra.mxu0 %v772
    %788 = vmatpush.bf16.msra.mxu0 %v771
    %789 = vmatpush.bf16.msra.mxu0 %v770
    %790 = vmatpush.bf16.msra.mxu0 %v769
    %791 = vmatpush.bf16.msra.mxu0 %v768
    %792 = vmatmul.bf16.gmra.mxu0 %v715
    %v793 = vpop.f32.mrf.mxu0
    %v794 = vadd.f32 %v734, %v793
    %v795 = vpop.f32.mrf.mxu0
    %v796 = vadd.f32 %v734, %v795
    %797 = vdwg.mxu0
    %v798 = vmax.f32 %v794, 0.0
    %v799 = vmax.f32 %v796, 0.0
    %v800 = vpack.c.bf16 %v799, %v798
    %v801 = vld [vmem:[#allocation16] sm:$0xf]
    %v802 = vld [vmem:[#allocation16 + $0x4] sm:$0xf]
    %v803 = vld [vmem:[#allocation16 + $0x8] sm:$0xf]
    %v804 = vld [vmem:[#allocation16 + $0xc] sm:$0xf]
    %v805 = vld [vmem:[#allocation16 + $0x10] sm:$0xf]
    %v806 = vld [vmem:[#allocation16 + $0x14] sm:$0xf]
    %v807 = vld [vmem:[#allocation16 + $0x18] sm:$0xf]
    %v808 = vld [vmem:[#allocation16 + $0x1c] sm:$0xf]
    %v809 = vld [vmem:[#allocation16 + $0x20] sm:$0xf]
    %v810 = vld [vmem:[#allocation16 + $0x24] sm:$0xf]
    %v811 = vld [vmem:[#allocation16 + $0x28] sm:$0xf]
    %v812 = vld [vmem:[#allocation16 + $0x2c] sm:$0xf]
    %v813 = vld [vmem:[#allocation16 + $0x30] sm:$0xf]
    %v814 = vld [vmem:[#allocation16 + $0x34] sm:$0xf]
    %v815 = vld [vmem:[#allocation16 + $0x38] sm:$0xf]
    %v816 = vld [vmem:[#allocation16 + $0x3c] sm:$0xf]
    %v817 = vld [vmem:[%s16] sm:$0x1]
    %v819 = vperm.slane %v817, 0
    %v837 = vunpack.c.l.b16 %v801
    %v838 = vunpack.c.l.b16 %v802
    %v839 = vunpack.c.l.b16 %v803
    %v840 = vunpack.c.l.b16 %v804
    %v841 = vunpack.c.l.b16 %v805
    %v842 = vunpack.c.l.b16 %v806
    %v843 = vunpack.c.l.b16 %v807
    %v844 = vunpack.c.l.b16 %v808
    %v845 = vunpack.c.l.b16 %v809
    %v846 = vunpack.c.l.b16 %v810
    %v847 = vunpack.c.l.b16 %v811
    %v848 = vunpack.c.l.b16 %v812
    %v849 = vunpack.c.l.b16 %v813
    %v850 = vunpack.c.l.b16 %v814
    %v851 = vunpack.c.l.b16 %v815
    %v852 = vunpack.c.l.b16 %v816
    %v853 = vpack.c.b16 %v838, %v837
    %v854 = vpack.c.b16 %v840, %v839
    %v855 = vpack.c.b16 %v842, %v841
    %v856 = vpack.c.b16 %v844, %v843
    %v857 = vpack.c.b16 %v846, %v845
    %v858 = vpack.c.b16 %v848, %v847
    %v859 = vpack.c.b16 %v850, %v849
    %v860 = vpack.c.b16 %v852, %v851
    %869 = vmatpush.bf16.msra.mxu0 %v860
    %870 = vmatpush.bf16.msra.mxu0 %v859
    %871 = vmatpush.bf16.msra.mxu0 %v858
    %872 = vmatpush.bf16.msra.mxu0 %v857
    %873 = vmatpush.bf16.msra.mxu0 %v856
    %874 = vmatpush.bf16.msra.mxu0 %v855
    %875 = vmatpush.bf16.msra.mxu0 %v854
    %876 = vmatpush.bf16.msra.mxu0 %v853
    %877 = vmatmul.bf16.gmra.mxu0 %v800
    %v878 = vpop.f32.mrf.mxu0
    %v879 = vadd.f32 %v819, %v878
    %v880 = vpop.f32.mrf.mxu0
    %v881 = vadd.f32 %v819, %v880
    %882 = vdwg.mxu0
    %883 = vst [vmem:[#allocation18] sm:$0xff] %v541
    %884 = vst [vmem:[#allocation18 + $0x8] sm:$0xff] %v543
    %885 = vst [vmem:[#allocation17] sm:$0xff] %v879
    %886 = vst [vmem:[#allocation17 + $0x8] sm:$0xff] %v881
    // Predicated region
    $region106: #{tpu_custom_call.1} parent=1 // pred_check
      _
    $region107: #{tpu_custom_call.1} parent=1 // pred_check_branch
      %888 = sbr.rel (0) target = $region109
    $region108: #{tpu_custom_call.1} parent=1 // pred_region
      %890 = vsyncadd [#allocation4], 0
      %s891 = sshll.u32 [#allocation17], 4
      %s892 = int_to_ptr.vmem [resolvable:$true] %s891
      %s893 = sshll.u32 %s17, 4
      %s894 = int_to_ptr.hbm [resolvable:$true] %s893
      %899 = dma.vmem_to_hbm [thread:$0]  %s892, 256, %s894, [#allocation4], 128, 128, 8
    $region109: #{tpu_custom_call.1} parent=1 // pred_fallthru
      _
    // Predicated region
    $region110: #{tpu_custom_call.1} parent=1 // pred_check
      _
    $region111: #{tpu_custom_call.1} parent=1 // pred_check_branch
      %901 = sbr.rel (0) target = $region113
    $region112: #{tpu_custom_call.1} parent=1 // pred_region
      %903 = vsyncadd [#allocation19], 0
      %s904 = sshll.u32 [#allocation18], 4
      %s905 = int_to_ptr.vmem [resolvable:$true] %s904
      %s906 = sshll.u32 %s18, 4
      %s907 = int_to_ptr.hbm [resolvable:$true] %s906
      %912 = dma.vmem_to_hbm [thread:$0]  %s905, 256, %s907, [#allocation19], 128, 128, 8
    $region113: #{tpu_custom_call.1} parent=1 // pred_fallthru
      _
    // Predicated region
    $region114: #{tpu_custom_call.1} parent=1 // pred_check
      _
    $region115: #{tpu_custom_call.1} parent=1 // pred_check_branch
      %914 = sbr.rel (0) target = $region117
    $region116: #{tpu_custom_call.1} parent=1 // pred_region
      %916 = dma.done [#allocation4], 256
    $region117: #{tpu_custom_call.1} parent=1 // pred_fallthru
      _
    // Predicated region
    $region118: #{tpu_custom_call.1} parent=1 // pred_check
      _
    $region119: #{tpu_custom_call.1} parent=1 // pred_check_branch
      %918 = sbr.rel (0) target = $region121
    $region120: #{tpu_custom_call.1} parent=1 // pred_region
      %920 = dma.done [#allocation19], 256
    $region121: #{tpu_custom_call.1} parent=1 // pred_fallthru
      _
    %921 = vsyncpa [#allocation3], 1
    %922 = vsyncpa [#allocation6], 1
    %923 = vsyncpa [#allocation9], 1
    %924 = vsyncpa [#allocation12], 1
    %925 = vsyncpa [#allocation15], 1
    %926 = vsyncpa [#allocation4], 1
    %927 = vsyncpa [#allocation19], 1

</llo_original>
